<compile_context>
chip_gen: v5e
topology: v5e:2x2
jax: 0.10.0
libtpu: 0.0.40
codegen_flags: <defaults>
</compile_context>

<pallas_src>
import functools

import jax
import jax.numpy as jnp
from jax.experimental import pallas as pl
from jax.experimental.pallas import tpu as pltpu

_LANE = 128
_SUBLANE = 8
_MAX_BLOCK_ROWS = 8192   # 8192 * 128 * 4B = 4 MiB per f32 input block
_CHUNK_ROWS = 1024       # in-kernel accumulation chunk (512 KiB f32 intermediates)


def _num_tensorcores() -> int:
    """Best-effort TensorCores-per-chip: 2 on megacore/v7x-class chips, else 1."""
    # TODO(synk): switch to pltpu.get_tpu_info() once it exposes a per-chip
    # TensorCore count; device_kind gating is the portable fallback.
    try:
        kind = jax.devices()[0].device_kind.lower().replace(" ", "")
        if "v4" in kind or "v7" in kind or "tpu7" in kind:
            return 2
        if "v5" in kind and "lite" not in kind and "v5e" not in kind:
            return 2  # v5p megacore
    except Exception:
        pass
    return 1


def _mse_partial_kernel(x_ref, y_ref, o_ref, acc_ref, *,
                        n_rows, block_rows, num_blocks, chunk_rows):
    """Per-core partial sum of (x - y)^2 over row-blocks.

    Grid = (core, block). The `core` axis is split across TensorCores; the
    `block` axis is a sequential reduction accumulated into the (8, 128) VMEM
    accumulator (pure vreg-wise VPU adds, no per-step cross-lane work).
    """
    c = pl.program_id(0)
    i = pl.program_id(1)
    inner = pl.num_programs(1)
    g = c * inner + i                      # unclamped global block index

    @pl.when(i == 0)
    def _init():
        acc_ref[...] = jnp.zeros_like(acc_ref)

    def accum(row0, nrows, row_limit):
        """Accumulate rows [row0, row0 + nrows) of this block into acc_ref."""
        d = (x_ref[pl.ds(row0, nrows), :].astype(jnp.float32)
             - y_ref[pl.ds(row0, nrows), :].astype(jnp.float32))
        d2 = d * d
        if row_limit is not None:
            # Discard garbage rows of the partially-DMA'd trailing block and
            # the fully-masked clamped duplicate blocks on the 2-core grid.
            # (Select, not multiply: any NaN/Inf garbage is dropped.)
            rid = jax.lax.broadcasted_iota(jnp.int32, (nrows, _LANE), 0)
            d2 = jnp.where(rid < row_limit, d2, 0.0)
        # (nrows,128) -> (nrows//8, 8, 128); axis-0 sum is plain vreg adds.
        acc_ref[...] += d2.reshape(nrows // _SUBLANE, _SUBLANE, _LANE).sum(axis=0)

    # Static chunk schedule (Python ints -> unrolled, small per-chunk temps).
    offsets = [(r0, min(chunk_rows, block_rows - r0))
               for r0 in range(0, block_rows, chunk_rows)]

    @pl.when(g < num_blocks - 1)
    def _interior():                       # full, in-bounds block: no masking
        for r0, nrows in offsets:
            accum(r0, nrows, None)

    @pl.when(g >= num_blocks - 1)
    def _edge():                           # last (possibly partial) or clamped dup
        rows_left = n_rows - g * block_rows   # <= 0 for clamped duplicate blocks
        for r0, nrows in offsets:
            accum(r0, nrows, rows_left - r0)

    @pl.when(i == inner - 1)
    def _finalize():
        o_ref[0] = acc_ref[...]


def perceptual_loss(input_image: jax.Array, target_image: jax.Array) -> jax.Array:
    """MSE loss (mean over all elements), computed with a Pallas TPU kernel.

    Equivalent to PerceptualLoss().forward(input_image, target_image).
    """
    assert input_image.shape == target_image.shape, "shape mismatch"
    n = int(input_image.size)

    xf = input_image.reshape(-1)
    yf = target_image.reshape(-1)

    rows = n // _LANE
    if n % _LANE != 0 or rows < _SUBLANE:
        # TODO(synk): a copy-free Pallas path for n % 128 != 0 needs a 1-D
        # BlockSpec + in-kernel (tr*128,)->(tr,128) fold; until that layout is
        # verified copy-free, a fused XLA reduction (one read of each array,
        # no full-array prefix-slice copy) is the cheaper option for this case.
        d = xf.astype(jnp.float32) - yf.astype(jnp.float32)
        return jnp.sum(d * d) / jnp.float32(n)

    x2 = xf.reshape(rows, _LANE)           # free reshape, no copy
    y2 = yf.reshape(rows, _LANE)

    # Block rows: up to 8192 (4 MiB / f32 input block), rounded DOWN to the
    # 8-row sublane tile and never larger than the array (trailing remainder
    # rows are covered by the standard partial last block + in-kernel mask).
    tr = min(_MAX_BLOCK_ROWS, (rows // _SUBLANE) * _SUBLANE)
    num_blocks = pl.cdiv(rows, tr)

    # Only emit the core-split axis on chips with 2 TensorCores, and never more
    # cores than blocks (avoids wasted duplicate-block DMAs on small inputs).
    num_cores = max(1, min(_num_tensorcores(), num_blocks))
    inner = pl.cdiv(num_blocks, num_cores)

    def in_map(c, i):
        # Clamp so a core with fewer real blocks re-reads the last valid block;
        # its contribution is fully masked in-kernel (rows_left <= 0).
        return (jnp.minimum(c * inner + i, num_blocks - 1), 0)

    kernel = functools.partial(
        _mse_partial_kernel,
        n_rows=rows, block_rows=tr, num_blocks=num_blocks,
        chunk_rows=min(_CHUNK_ROWS, tr))

    itemsize = jnp.dtype(x2.dtype).itemsize
    block_bytes = tr * _LANE * itemsize
    # 2 inputs x 2 pipeline buffers + chunk intermediates + headroom; stays
    # under per-TC physical VMEM on every generation (v7x: 64 MiB).
    vmem_limit = int(min(max(2 * (4 * block_bytes + (2 << 20)), 16 << 20), 48 << 20))

    # TODO(synk): if an xprof trace on v7x shows only one TC active, switch the
    # core axis to pltpu.CORE_PARALLEL; if inter-step DMA bubbles remain after
    # the 4 MiB blocks, add pipeline_mode=pl.Buffered(3) to the input specs.
    partials = pl.pallas_call(
        kernel,
        out_shape=jax.ShapeDtypeStruct((num_cores, _SUBLANE, _LANE), jnp.float32),
        grid_spec=pltpu.PrefetchScalarGridSpec(
            num_scalar_prefetch=0,
            grid=(num_cores, inner),
            in_specs=[
                pl.BlockSpec((tr, _LANE), in_map),
                pl.BlockSpec((tr, _LANE), in_map),
            ],
            out_specs=pl.BlockSpec((1, _SUBLANE, _LANE), lambda c, i: (c, 0, 0)),
            scratch_shapes=[pltpu.VMEM((_SUBLANE, _LANE), jnp.float32)],
        ),
        compiler_params=pltpu.CompilerParams(
            dimension_semantics=("parallel", "arbitrary"),
            vmem_limit_bytes=vmem_limit,
        ),
    )(x2, y2)

    return jnp.sum(partials) / jnp.float32(n)


if __name__ == "__main__":
    key = jax.random.PRNGKey(0)
    k1, k2, k3, k4 = jax.random.split(key, 4)

    # Primary check: NCHW image pair (matches the PyTorch conv-style layout).
    x = jax.random.normal(k1, (2, 4, 16, 16), dtype=jnp.float32)
    y = jax.random.normal(k2, (2, 4, 16, 16), dtype=jnp.float32)
    loss = perceptual_loss(x, y)
    jax.block_until_ready(loss)
    ref = jnp.mean((x - y) ** 2)
    assert jnp.allclose(loss, ref, rtol=1e-5, atol=1e-6), (loss, ref)

    # Secondary check: rows = 12 exercises the multi-block grid, the partial
    # trailing block DMA and the edge-only masking path.
    xb = jax.random.normal(k3, (2, 3, 16, 16), dtype=jnp.float32)
    yb = jax.random.normal(k4, (2, 3, 16, 16), dtype=jnp.float32)
    loss_b = perceptual_loss(xb, yb)
    jax.block_until_ready(loss_b)
    ref_b = jnp.mean((xb - yb) ** 2)
    assert jnp.allclose(loss_b, ref_b, rtol=1e-5, atol=1e-6), (loss_b, ref_b)

    print("KERNEL_OK")
</pallas_src>

<mosaic_0001>
module attributes {stable_mosaic.version = 11 : i64} {
  func.func @_mse_partial_kernel(%arg0: i32, %arg1: i32, %arg2: memref<16x128xf32, #tpu.memory_space<vmem>>, %arg3: memref<16x128xf32, #tpu.memory_space<vmem>>, %arg4: memref<1x8x128xf32, #tpu.memory_space<vmem>>, %arg5: memref<8x128xf32, #tpu.memory_space<vmem>>) attributes {dimension_semantics = [#tpu.dimension_semantics<parallel>, #tpu.dimension_semantics<arbitrary>], iteration_bounds = array<i64: 1, 1>, scalar_prefetch = 0 : i64, scratch_operands = 1 : i64, tpu.core_type = #tpu.core_type<tc>, window_params = [{transform_indices = @transform_0, window_bounds = array<i64: 16, 128>}, {transform_indices = @transform_1, window_bounds = array<i64: 16, 128>}, {transform_indices = @transform_2, window_bounds = array<i64: 1, 8, 128>}]} {
    %c1_i32 = arith.constant 1 : i32
    %0 = arith.muli %arg0, %c1_i32 : i32
    %1 = arith.addi %0, %arg1 : i32
    %c0_i32 = arith.constant 0 : i32
    %2 = arith.cmpi eq, %arg1, %c0_i32 : i32
    %3 = arith.extui %2 : i1 to i32
    %c0_i32_0 = arith.constant 0 : i32
    %4 = arith.cmpi ne, %3, %c0_i32_0 : i32
    scf.if %4 {
      %cst = arith.constant 0.000000e+00 : f32
      %14 = vector.broadcast %cst : f32 to vector<8x128xf32>
      %c0 = arith.constant 0 : index
      %c0_7 = arith.constant 0 : index
      %15 = vector.load %arg5[%c0, %c0_7] : memref<8x128xf32, #tpu.memory_space<vmem>>, vector<8x128xf32>
      tpu.vector_store %arg5[%c0, %c0_7], %14 {strides = array<i32>} : memref<8x128xf32, #tpu.memory_space<vmem>>, vector<8x128xf32>,
    } else {
    }
    %c0_i32_1 = arith.constant 0 : i32
    %5 = arith.cmpi slt, %1, %c0_i32_1 : i32
    %6 = arith.extui %5 : i1 to i32
    %c0_i32_2 = arith.constant 0 : i32
    %7 = arith.cmpi ne, %6, %c0_i32_2 : i32
    scf.if %7 {
      %c0 = arith.constant 0 : index
      %c0_7 = arith.constant 0 : index
      %14 = vector.load %arg2[%c0, %c0_7] : memref<16x128xf32, #tpu.memory_space<vmem>>, vector<16x128xf32>
      %c0_8 = arith.constant 0 : index
      %c0_9 = arith.constant 0 : index
      %15 = vector.load %arg3[%c0_8, %c0_9] : memref<16x128xf32, #tpu.memory_space<vmem>>, vector<16x128xf32>
      %16 = arith.subf %14, %15 : vector<16x128xf32>
      %17 = arith.mulf %16, %16 : vector<16x128xf32>
      %c0_10 = arith.constant 0 : index
      %c0_11 = arith.constant 0 : index
      %18 = vector.load %arg5[%c0_10, %c0_11] : memref<8x128xf32, #tpu.memory_space<vmem>>, vector<8x128xf32>
      %19 = vector.shape_cast %17 : vector<16x128xf32> to vector<2x8x128xf32>
      %cst = arith.constant dense<0.000000e+00> : vector<8x128xf32>
      %20 = vector.multi_reduction <add>, %19, %cst [0] : vector<2x8x128xf32> to vector<8x128xf32>
      %21 = arith.addf %18, %20 : vector<8x128xf32>
      %c0_12 = arith.constant 0 : index
      %c0_13 = arith.constant 0 : index
      %22 = vector.load %arg5[%c0_12, %c0_13] : memref<8x128xf32, #tpu.memory_space<vmem>>, vector<8x128xf32>
      tpu.vector_store %arg5[%c0_12, %c0_13], %21 {strides = array<i32>} : memref<8x128xf32, #tpu.memory_space<vmem>>, vector<8x128xf32>,
    } else {
    }
    %c0_i32_3 = arith.constant 0 : i32
    %8 = arith.cmpi sge, %1, %c0_i32_3 : i32
    %9 = arith.extui %8 : i1 to i32
    %c0_i32_4 = arith.constant 0 : i32
    %10 = arith.cmpi ne, %9, %c0_i32_4 : i32
    scf.if %10 {
      %c16_i32 = arith.constant 16 : i32
      %14 = arith.muli %1, %c16_i32 : i32
      %c16_i32_7 = arith.constant 16 : i32
      %15 = arith.subi %c16_i32_7, %14 : i32
      %c0_i32_8 = arith.constant 0 : i32
      %16 = arith.subi %15, %c0_i32_8 : i32
      %c0 = arith.constant 0 : index
      %c0_9 = arith.constant 0 : index
      %17 = vector.load %arg2[%c0, %c0_9] : memref<16x128xf32, #tpu.memory_space<vmem>>, vector<16x128xf32>
      %c0_10 = arith.constant 0 : index
      %c0_11 = arith.constant 0 : index
      %18 = vector.load %arg3[%c0_10, %c0_11] : memref<16x128xf32, #tpu.memory_space<vmem>>, vector<16x128xf32>
      %19 = arith.subf %17, %18 : vector<16x128xf32>
      %20 = arith.mulf %19, %19 : vector<16x128xf32>
      %21 = tpu.iota {dimensions = array<i32: 0>} : vector<16x128xi32>
      %22 = vector.broadcast %16 : i32 to vector<16x128xi32>
      %23 = arith.cmpi slt, %21, %22 : vector<16x128xi32>
      %cst = arith.constant 0.000000e+00 : f32
      %24 = vector.broadcast %cst : f32 to vector<16x128xf32>
      %25 = arith.select %23, %20, %24 : vector<16x128xi1>, vector<16x128xf32>
      %c0_12 = arith.constant 0 : index
      %c0_13 = arith.constant 0 : index
      %26 = vector.load %arg5[%c0_12, %c0_13] : memref<8x128xf32, #tpu.memory_space<vmem>>, vector<8x128xf32>
      %27 = vector.shape_cast %25 : vector<16x128xf32> to vector<2x8x128xf32>
      %cst_14 = arith.constant dense<0.000000e+00> : vector<8x128xf32>
      %28 = vector.multi_reduction <add>, %27, %cst_14 [0] : vector<2x8x128xf32> to vector<8x128xf32>
      %29 = arith.addf %26, %28 : vector<8x128xf32>
      %c0_15 = arith.constant 0 : index
      %c0_16 = arith.constant 0 : index
      %30 = vector.load %arg5[%c0_15, %c0_16] : memref<8x128xf32, #tpu.memory_space<vmem>>, vector<8x128xf32>
      tpu.vector_store %arg5[%c0_15, %c0_16], %29 {strides = array<i32>} : memref<8x128xf32, #tpu.memory_space<vmem>>, vector<8x128xf32>,
    } else {
    }
    %c0_i32_5 = arith.constant 0 : i32
    %11 = arith.cmpi eq, %arg1, %c0_i32_5 : i32
    %12 = arith.extui %11 : i1 to i32
    %c0_i32_6 = arith.constant 0 : i32
    %13 = arith.cmpi ne, %12, %c0_i32_6 : i32
    scf.if %13 {
      %c0 = arith.constant 0 : index
      %c0_7 = arith.constant 0 : index
      %14 = vector.load %arg5[%c0, %c0_7] : memref<8x128xf32, #tpu.memory_space<vmem>>, vector<8x128xf32>
      %c0_8 = arith.constant 0 : index
      %c0_9 = arith.constant 0 : index
      %c0_10 = arith.constant 0 : index
      %15 = vector.load %arg4[%c0_8, %c0_9, %c0_10] : memref<1x8x128xf32, #tpu.memory_space<vmem>>, vector<1x8x128xf32>
      %16 = vector.shape_cast %15 : vector<1x8x128xf32> to vector<8x128xf32>
      %17 = vector.shape_cast %14 : vector<8x128xf32> to vector<1x8x128xf32>
      tpu.vector_store %arg4[%c0_8, %c0_9, %c0_10], %17 {strides = array<i32>} : memref<1x8x128xf32, #tpu.memory_space<vmem>>, vector<1x8x128xf32>,
    } else {
    }
    return
  }
  func.func @transform_0(%arg0: i32, %arg1: i32) -> (i32, i32) {
    %c1_i32 = arith.constant 1 : i32
    %0 = arith.muli %arg0, %c1_i32 : i32
    %1 = arith.addi %0, %arg1 : i32
    %c0_i32 = arith.constant 0 : i32
    %2 = arith.minsi %1, %c0_i32 : i32
    %c0_i32_0 = arith.constant 0 : i32
    %c0_i32_1 = arith.constant 0 : i32
    return %2, %c0_i32_0 : i32, i32
  }
  func.func @transform_1(%arg0: i32, %arg1: i32) -> (i32, i32) {
    %c1_i32 = arith.constant 1 : i32
    %0 = arith.muli %arg0, %c1_i32 : i32
    %1 = arith.addi %0, %arg1 : i32
    %c0_i32 = arith.constant 0 : i32
    %2 = arith.minsi %1, %c0_i32 : i32
    %c0_i32_0 = arith.constant 0 : i32
    %c0_i32_1 = arith.constant 0 : i32
    return %2, %c0_i32_0 : i32, i32
  }
  func.func @transform_2(%arg0: i32, %arg1: i32) -> (i32, i32, i32) {
    %c0_i32 = arith.constant 0 : i32
    %c0_i32_0 = arith.constant 0 : i32
    %c0_i32_1 = arith.constant 0 : i32
    return %arg0, %c0_i32, %c0_i32_0 : i32, i32, i32
  }
}

</mosaic_0001>

<llo_original>
// kernel: tpu_custom_call.1
$region0: #{tpu_custom_call.1}
  #allocation0 [shape = 'u32[]', space=smem, size = 0x4, offset = 0x4, fixed_abs, tag = 'smem constant byte address 0x4 - core index']
  #allocation1 [shape = 'u32[72,128]{1,0:T(1,128)}', space=vmem, size = 0x9000, scoped, tag = 'internal scratch']
  #allocation2 [shape = 'f32[8,128]{1,0:T(8,128)}', space=vmem, size = 0x1000, scoped, tag = 'scratch operand']
  %s0 = inlined_call_operand.hbm [shape: f32[16,128], index: 0, kind: input, shape index: {}]
  %s1 = inlined_call_operand.hbm [shape: f32[16,128], index: 1, kind: input, shape index: {}]
  %s2 = inlined_call_operand.hbm [shape: f32[1,8,128], index: 2, kind: output, shape index: {}]
  %s3 = sld [smem:[#allocation0]]
  $region42: #{tpu_custom_call.1} parent=0
    _
  %s5 = ssub.s32 1, %s3
  %s6 = scalar_select 0, %s5, %s3
  $region1: #{tpu_custom_call.1} parent=0
    #allocation3 [shape = 'u8[8192]{0}', space=vmem, size = 0x2000, scoped, tag = 'input window, operand 0, single buffered']
    #allocation4 [shape = 's32[1]{0}', space=sflag, size = 0x4, scoped, tag = 'scoped memory for tpu_custom_call.1']
    #allocation5 [shape = 's32[1]{0}', space=sflag, size = 0x4, scoped, tag = 'scoped memory for tpu_custom_call.1']
    #allocation6 [shape = 'u8[8192]{0}', space=vmem, size = 0x2000, scoped, tag = 'input window, operand 1, single buffered']
    #allocation7 [shape = 's32[1]{0}', space=sflag, size = 0x4, scoped, tag = 'scoped memory for tpu_custom_call.1']
    #allocation8 [shape = 'u8[4096]{0}', space=vmem, size = 0x1000, scoped, tag = 'output window, operand 0, single buffered']
    %7 = vsyncpa [#allocation4], 0
    %8 = vsyncpa [#allocation7], 0
    %9 = vsyncpa [#allocation5], 0
    // Predicated region
    $region2: #{tpu_custom_call.1} parent=1 // pred_check
      _
    $region3: #{tpu_custom_call.1} parent=1 // pred_check_branch
      %11 = sbr.rel (0) target = $region5
    $region4: #{tpu_custom_call.1} parent=1 // pred_region
      %s12 = sadd.s32 0, 0
      %p13 = scmp.lt.s32.totalorder %s12, 0
      %s14 = scalar_select %p13, %s12, 0
      %s15 = smul.u32 2, %s14
      %17 = vsyncadd [#allocation4], 0
      %s18 = smul.addr %s15, 8
      %s19 = scalar_lea.hbm %s0, %s18
      %s20 = sshll.u32 %s19, 4
      %s21 = int_to_ptr.hbm [resolvable:$true] %s20
      %s22 = sshll.u32 [#allocation3], 4
      %s23 = int_to_ptr.vmem [resolvable:$true] %s22
      %28 = dma.hbm_to_vmem [thread:$0]  %s21, 256, %s23, [#allocation4], 128, 128, 8
    $region5: #{tpu_custom_call.1} parent=1 // pred_fallthru
      _
    // Predicated region
    $region6: #{tpu_custom_call.1} parent=1 // pred_check
      _
    $region7: #{tpu_custom_call.1} parent=1 // pred_check_branch
      %30 = sbr.rel (0) target = $region9
    $region8: #{tpu_custom_call.1} parent=1 // pred_region
      %s31 = sadd.s32 0, 0
      %p32 = scmp.lt.s32.totalorder %s31, 0
      %s33 = scalar_select %p32, %s31, 0
      %s34 = smul.u32 2, %s33
      %36 = vsyncadd [#allocation7], 0
      %s37 = smul.addr %s34, 8
      %s38 = scalar_lea.hbm %s1, %s37
      %s39 = sshll.u32 %s38, 4
      %s40 = int_to_ptr.hbm [resolvable:$true] %s39
      %s41 = sshll.u32 [#allocation6], 4
      %s42 = int_to_ptr.vmem [resolvable:$true] %s41
      %47 = dma.hbm_to_vmem [thread:$0]  %s40, 256, %s42, [#allocation7], 128, 128, 8
    $region9: #{tpu_custom_call.1} parent=1 // pred_fallthru
      _
    // Predicated region
    $region10: #{tpu_custom_call.1} parent=1 // pred_check
      _
    $region11: #{tpu_custom_call.1} parent=1 // pred_check_branch
      %49 = sbr.rel (0) target = $region13
    $region12: #{tpu_custom_call.1} parent=1 // pred_region
      %51 = dma.done [#allocation4], 256
    $region13: #{tpu_custom_call.1} parent=1 // pred_fallthru
      _
    // Predicated region
    $region14: #{tpu_custom_call.1} parent=1 // pred_check
      _
    $region15: #{tpu_custom_call.1} parent=1 // pred_check_branch
      %53 = sbr.rel (0) target = $region17
    $region16: #{tpu_custom_call.1} parent=1 // pred_region
      %55 = dma.done [#allocation7], 256
    $region17: #{tpu_custom_call.1} parent=1 // pred_fallthru
      _
    %s56 = sadd.s32 0, 0
    %p57 = scmp.lt.s32.totalorder %s56, 0
    %s58 = scalar_select %p57, %s56, 0
    %s59 = smul.u32 2, %s58
    %s60 = sadd.s32 0, 0
    %p61 = scmp.lt.s32.totalorder %s60, 0
    %s62 = scalar_select %p61, %s60, 0
    %s63 = smul.u32 2, %s62
    %s64 = sadd.s32 0, 0
    %p65 = scmp.eq.s32.totalorder 0, 0
    // Predicated region
    $region18: #{tpu_custom_call.1} parent=1 // pred_check
      %p66 = pneg %p65
    $region19: #{tpu_custom_call.1} parent=1 // pred_check_branch
      %68 = sbr.rel (%p66) target = $region21
    $region20: #{tpu_custom_call.1} parent=1 // pred_region
      %69 = vst [vmem:[#allocation2] sm:$0xff] 0.0
    $region21: #{tpu_custom_call.1} parent=1 // pred_fallthru
      _
    %p70 = scmp.lt.s32.totalorder %s64, 0
    // Predicated region
    $region22: #{tpu_custom_call.1} parent=1 // pred_check
      %p71 = pneg %p70
    $region23: #{tpu_custom_call.1} parent=1 // pred_check_branch
      %73 = sbr.rel (%p71) target = $region25
    $region24: #{tpu_custom_call.1} parent=1 // pred_region
      %v74 = vld [vmem:[#allocation3] sm:$0xff]
      %v75 = vld [vmem:[#allocation3 + $0x8] sm:$0xff]
      %v76 = vld [vmem:[#allocation6] sm:$0xff]
      %v77 = vld [vmem:[#allocation6 + $0x8] sm:$0xff]
      %v78 = vsub.f32 %v74, %v76
      %v79 = vsub.f32 %v75, %v77
      %v80 = vmul.f32 %v78, %v78
      %v81 = vmul.f32 %v79, %v79
      %v82 = vld [vmem:[#allocation2] sm:$0xff]
      %v83 = vadd.f32 %v80, %v81
      %v84 = vadd.f32 %v82, %v83
      %85 = vst [vmem:[#allocation2] sm:$0xff] %v84
    $region25: #{tpu_custom_call.1} parent=1 // pred_fallthru
      _
    %p86 = scmp.ge.s32.totalorder %s64, 0
    // Predicated region
    $region26: #{tpu_custom_call.1} parent=1 // pred_check
      %p87 = pneg %p86
    $region27: #{tpu_custom_call.1} parent=1 // pred_check_branch
      %89 = sbr.rel (%p87) target = $region29
    $region28: #{tpu_custom_call.1} parent=1 // pred_region
      %s90 = smul.u32 %s64, 16
      %s91 = ssub.s32 16, %s90
      %v92 = vld [vmem:[#allocation3] sm:$0xff]
      %v93 = vld [vmem:[#allocation3 + $0x8] sm:$0xff]
      %v94 = vld [vmem:[#allocation6] sm:$0xff]
      %v95 = vld [vmem:[#allocation6 + $0x8] sm:$0xff]
      %v96 = vsub.f32 %v92, %v94
      %v97 = vsub.f32 %v93, %v95
      %v98 = vmul.f32 %v96, %v96
      %v99 = vmul.f32 %v97, %v97
      %v100 = vlaneseq
      %v101 = vshrl.u32 %v100, 7
      %v102 = vadd.s32 %v101, 8
      %v103 = vstv %s91
      %vm104 = vcmp.lt.s32.totalorder %v101, %v103
      %vm105 = vcmp.lt.s32.totalorder %v102, %v103
      %v106 = vsel %vm104, %v98, 0.0
      %v107 = vsel %vm105, %v99, 0.0
      %v108 = vld [vmem:[#allocation2] sm:$0xff]
      %v109 = vadd.f32 %v106, %v107
      %v110 = vadd.f32 %v108, %v109
      %111 = vst [vmem:[#allocation2] sm:$0xff] %v110
    $region29: #{tpu_custom_call.1} parent=1 // pred_fallthru
      _
    // Predicated region
    $region30: #{tpu_custom_call.1} parent=1 // pred_check
      %p112 = pneg %p65
    $region31: #{tpu_custom_call.1} parent=1 // pred_check_branch
      %114 = sbr.rel (%p112) target = $region33
    $region32: #{tpu_custom_call.1} parent=1 // pred_region
      %v115 = vld [vmem:[#allocation2] sm:$0xff]
      %116 = vst [vmem:[#allocation8] sm:$0xff] %v115
    $region33: #{tpu_custom_call.1} parent=1 // pred_fallthru
      _
    // Predicated region
    $region34: #{tpu_custom_call.1} parent=1 // pred_check
      _
    $region35: #{tpu_custom_call.1} parent=1 // pred_check_branch
      %118 = sbr.rel (0) target = $region37
    $region36: #{tpu_custom_call.1} parent=1 // pred_region
      %120 = vsyncadd [#allocation5], 0
      %s122 = sshll.u32 [#allocation8], 4
      %s123 = int_to_ptr.vmem [resolvable:$true] %s122
      %s124 = sshll.u32 %s2, 4
      %s125 = int_to_ptr.hbm [resolvable:$true] %s124
      %127 = dma.vmem_to_hbm [thread:$0]  %s123, 128, %s125, [#allocation5]
    $region37: #{tpu_custom_call.1} parent=1 // pred_fallthru
      _
    // Predicated region
    $region38: #{tpu_custom_call.1} parent=1 // pred_check
      _
    $region39: #{tpu_custom_call.1} parent=1 // pred_check_branch
      %129 = sbr.rel (0) target = $region41
    $region40: #{tpu_custom_call.1} parent=1 // pred_region
      %131 = dma.done [#allocation5], 128
    $region41: #{tpu_custom_call.1} parent=1 // pred_fallthru
      _
    %132 = vsyncpa [#allocation4], 1
    %133 = vsyncpa [#allocation7], 1
    %134 = vsyncpa [#allocation5], 1

</llo_original>
